<compile_context>
chip_gen: v5e
topology: v5e:2x2
jax: 0.10.0
libtpu: 0.0.40
codegen_flags: <defaults>
</compile_context>

<pallas_src>
import numpy as np
import jax
import jax.numpy as jnp
from jax.experimental import pallas as pl
from jax.experimental.pallas import tpu as pltpu

LANE = 128
SUB = 16  # sublane granularity covering both bf16 and f32 packing


def _round_up(x: int, m: int) -> int:
    return (x + m - 1) // m * m


# --------------------------------------------------------------------------
# Parameter packing: fuse/pad all the tiny Linears into lane-dense slabs.
# Zero padding keeps the math exact (zero rows/cols contribute nothing,
# ReLU(0) = 0).
# --------------------------------------------------------------------------
def _pack_params(input_dim, params, output_dims, compute_dtype, fuse):
    n_tasks = len(output_dims)
    common = params["common"]
    branches = params["branches"]
    heads = params["heads"]
    n_common = len(common)
    nbl = len(branches[0]) if n_tasks else 0
    assert nbl >= 1, "at least one branch hidden layer is assumed"

    flat_w, bias_chunks, bias_offs, mm_dims = [], [], [], []
    cursor = [0]

    def add(wp, bp):
        flat_w.append(wp)
        bias_chunks.append(bp)
        bias_offs.append(cursor[0])
        cursor[0] += bp.shape[1]
        mm_dims.append(wp.shape)

    def pad_linear(w, b, rows_true, rows_pad, cols_true, cols_pad):
        wp = jnp.zeros((rows_pad, cols_pad), compute_dtype)
        wp = wp.at[:rows_true, :cols_true].set(w.astype(compute_dtype))
        bp = jnp.zeros((1, cols_pad), jnp.float32)
        bp = bp.at[:, :cols_true].set(jnp.reshape(b, (1, -1)).astype(jnp.float32))
        return wp, bp

    # ---- common trunk: first K is the true input_dim (x is not col-padded) ----
    d_in, d_in_pad = input_dim, input_dim
    for (w, b) in common:
        d_out = w.shape[1]
        d_out_pad = _round_up(d_out, LANE)
        add(*pad_linear(w, b, d_in, d_in_pad, d_out, d_out_pad))
        d_in, d_in_pad = d_out, d_out_pad
    trunk_out, trunk_out_pad = d_in, d_in_pad

    sum_out = sum(output_dims)
    offs = [0]
    for d in output_dims:
        offs.append(offs[-1] + d)

    if fuse:
        # Branch layers fused across branches (block-diagonal weights); all
        # heads fused into one block-structured matmul.  Good for 2-3 tasks.
        prev_per_branch = None          # None -> input is the shared trunk out
        prev_total_pad = trunk_out_pad
        for j in range(nbl):
            h_out = branches[0][j][0].shape[1]
            out_total_pad = _round_up(n_tasks * h_out, LANE)
            wp = jnp.zeros((prev_total_pad, out_total_pad), compute_dtype)
            bp = jnp.zeros((1, out_total_pad), jnp.float32)
            for br in range(n_tasks):
                w, bias = branches[br][j]
                c0 = br * h_out
                if prev_per_branch is None:
                    r0, rows = 0, trunk_out
                else:
                    r0, rows = br * prev_per_branch, prev_per_branch
                wp = wp.at[r0:r0 + rows, c0:c0 + h_out].set(w.astype(compute_dtype))
                bp = bp.at[:, c0:c0 + h_out].set(
                    jnp.reshape(bias, (1, -1)).astype(jnp.float32))
            add(wp, bp)
            prev_per_branch, prev_total_pad = h_out, out_total_pad
        latent_dim, latent_w = prev_per_branch, prev_total_pad

        head_w = _round_up(n_tasks * sum_out, LANE)
        wh = jnp.zeros((latent_w, head_w), compute_dtype)
        bh = jnp.zeros((1, head_w), jnp.float32)
        for br in range(n_tasks):
            for t in range(n_tasks):
                w, bias = heads[br][t]
                r0 = br * latent_dim
                c0 = br * sum_out + offs[t]
                wh = wh.at[r0:r0 + latent_dim, c0:c0 + output_dims[t]].set(
                    w.astype(compute_dtype))
                bh = bh.at[:, c0:c0 + output_dims[t]].set(
                    jnp.reshape(bias, (1, -1)).astype(jnp.float32))
        add(wh, bh)

        latent_stride, head_stride = latent_dim, sum_out
        lat_seg, so_seg = latent_w, head_w          # unused in fused kernel path
    else:
        # Per-branch weights (O(n_tasks) bytes); the kernel loops statically
        # over branches doing small lane-dense matmuls.  Good for n_tasks >= 4.
        latent_dim = branches[0][nbl - 1][0].shape[1]
        lat_seg = _round_up(latent_dim, LANE)
        so_seg = _round_up(sum_out, LANE)
        for br in range(n_tasks):
            prev, prev_pad = trunk_out, trunk_out_pad
            for j in range(nbl):
                w, bias = branches[br][j]
                h_out = w.shape[1]
                h_pad = _round_up(h_out, LANE)
                add(*pad_linear(w, bias, prev, prev_pad, h_out, h_pad))
                prev, prev_pad = h_out, h_pad
            wh = jnp.zeros((prev_pad, so_seg), compute_dtype)
            bh = jnp.zeros((1, so_seg), jnp.float32)
            for t in range(n_tasks):
                w, bias = heads[br][t]
                wh = wh.at[:prev, offs[t]:offs[t] + output_dims[t]].set(
                    w.astype(compute_dtype))
                bh = bh.at[:, offs[t]:offs[t] + output_dims[t]].set(
                    jnp.reshape(bias, (1, -1)).astype(jnp.float32))
            add(wh, bh)
        latent_w = n_tasks * lat_seg
        head_w = n_tasks * so_seg
        latent_stride, head_stride = lat_seg, so_seg

    bias_slab = jnp.concatenate(bias_chunks, axis=1)
    return dict(weights=flat_w, bias=bias_slab, bias_offs=tuple(bias_offs),
                mm_dims=mm_dims, n_common=n_common, n_branch_layers=nbl,
                latent_dim=latent_dim, latent_w=latent_w, head_w=head_w,
                latent_stride=latent_stride, head_stride=head_stride,
                offs=offs, sum_out=sum_out, lat_seg=lat_seg, so_seg=so_seg)


# --------------------------------------------------------------------------
# Kernel
# --------------------------------------------------------------------------
def _make_kernel(n_common, nbl, n_tasks, fuse, n_w, bias_offs,
                 lat_seg, so_seg, compute_dtype):
    def kernel(*refs):
        x_ref = refs[0]
        w_refs = refs[1:1 + n_w]
        b_ref = refs[1 + n_w]                 # one concatenated f32 bias slab
        latent_ref = refs[2 + n_w]
        head_ref = refs[3 + n_w]

        def dense(h, k, relu):
            w = w_refs[k][...]
            n = w.shape[1]
            o = bias_offs[k]
            y = (jnp.dot(h.astype(compute_dtype), w,
                         preferred_element_type=jnp.float32)
                 + b_ref[:, o:o + n])
            return jnp.maximum(y, 0.0) if relu else y

        # ---- common trunk: Linear + ReLU (x cast happens inside dense) ----
        h = x_ref[...]
        for i in range(n_common):
            h = dense(h, i, relu=True)

        if fuse:
            # ---- branches fused block-diagonally, all heads in one matmul ----
            lat = h
            for j in range(nbl):
                lat = dense(lat, n_common + j, relu=(j + 1 < nbl))
            latent_ref[...] = lat.astype(latent_ref.dtype)   # pre-activation latents
            head_ref[...] = dense(jnp.maximum(lat, 0.0), n_common + nbl,
                                  relu=False).astype(head_ref.dtype)
        else:
            # ---- static loop over branches (weights O(n_tasks)) ----
            k = n_common
            for br in range(n_tasks):
                lat = h
                for j in range(nbl):
                    lat = dense(lat, k, relu=(j + 1 < nbl))
                    k += 1
                latent_ref[:, br * lat_seg:(br + 1) * lat_seg] = (
                    lat.astype(latent_ref.dtype))
                head_ref[:, br * so_seg:(br + 1) * so_seg] = dense(
                    jnp.maximum(lat, 0.0), k, relu=False).astype(head_ref.dtype)
                k += 1

    return kernel


# --------------------------------------------------------------------------
# Wrapper
# --------------------------------------------------------------------------
def _vmem_ceiling_bytes():
    """Generation-aware VMEM cap with headroom (≈48 MiB v7x, ≈96 MiB v5e/v6e)."""
    try:
        info = pltpu.get_tpu_info()
        cap = getattr(info, "vmem_capacity_bytes", None)
        if cap:
            return int(cap * 0.75)
    except Exception:
        pass
    return 48 << 20  # conservative fallback that fits v7x's 64 MiB/TC


def _resident_spec(shape, buffered):
    """Whole-array block with constant index_map (stays resident in VMEM)."""
    idx = lambda *_: (0,) * len(shape)
    if buffered:
        try:
            # Constant-index blocks are never re-DMA'd: single buffer halves
            # the VMEM they hold at zero DMA cost.
            return pl.BlockSpec(shape, idx, pipeline_mode=pl.Buffered(1))
        except (TypeError, AttributeError):
            pass
    return pl.BlockSpec(shape, idx)


def task_branches_forward(x, params, output_dims, *,
                          compute_dtype=jnp.bfloat16,
                          out_dtype=None,
                          batch_tile=1024,
                          fuse_branches=None,
                          return_slabs=False):
    """params = dict with 'common', 'branches', 'heads' lists of (W, b).

    W is (in_dim, out_dim) (transposed vs. PyTorch), b is (out_dim,) or (1, out_dim).
    Returns (latents, outs) matching the PyTorch module, or
    (latent_slab, head_slab, meta) when return_slabs=True.
    """
    n_tasks = len(output_dims)
    B, input_dim = x.shape
    if out_dtype is None:
        out_dtype = compute_dtype
    if fuse_branches is None:
        fuse_branches = n_tasks <= 3   # block-diag fusion scales O(n_tasks^2)

    packed = _pack_params(input_dim, params, output_dims, compute_dtype,
                          fuse_branches)
    weights, bias = packed["weights"], packed["bias"]
    n_w = len(weights)
    latent_w, head_w = packed["latent_w"], packed["head_w"]

    # ---- batch tiling: pad only the batch dim (multiple of 16) ----
    b16 = max(_round_up(B, SUB), SUB)
    tb = min(_round_up(batch_tile, SUB), b16)
    # v7x megacore: make sure there are >=2 grid steps to shard across 2 TCs.
    if b16 // tb < 2 and b16 >= 2 * SUB:
        tb = _round_up(pl.cdiv(b16, 2), SUB)
    # Equalize tiles if that reduces tail-padding waste.
    steps = pl.cdiv(b16, tb)
    tb_eq = _round_up(pl.cdiv(b16, steps), SUB)
    if _round_up(b16, tb_eq) < _round_up(b16, tb):
        tb = tb_eq
    b_pad = _round_up(b16, tb)
    grid = (b_pad // tb,)

    # Row-pad x only when necessary (no feature-dim pad, no dtype cast pass).
    if b_pad == B:
        x_in = x
    else:
        x_in = jnp.zeros((b_pad, input_dim), x.dtype).at[:B].set(x)

    out_itemsize = np.dtype(out_dtype).itemsize
    out_specs = (pl.BlockSpec((tb, latent_w), lambda i: (i, 0)),
                 pl.BlockSpec((tb, head_w), lambda i: (i, 0)))
    out_shape = (jax.ShapeDtypeStruct((b_pad, latent_w), out_dtype),
                 jax.ShapeDtypeStruct((b_pad, head_w), out_dtype))

    # Advisory cost estimate for XLA's scheduler.
    flops = 2 * b_pad * sum(k * n for (k, n) in packed["mm_dims"])
    w_bytes = (sum(w.size * w.dtype.itemsize for w in weights)
               + bias.size * bias.dtype.itemsize)
    bytes_accessed = (x_in.size * x_in.dtype.itemsize + w_bytes
                      + b_pad * (latent_w + head_w) * out_itemsize)
    cost = pl.CostEstimate(flops=int(flops), transcendentals=0,
                           bytes_accessed=int(bytes_accessed))

    # VMEM budget: single-buffered resident weights + double-buffered batch
    # tiles + working set, capped by the generation-aware ceiling.
    io_bytes = 2 * tb * (input_dim * x_in.dtype.itemsize
                         + (latent_w + head_w) * out_itemsize)
    max_n = max(w.shape[1] for w in weights)
    work_bytes = 8 * tb * max_n * 4
    vmem_limit = int(min(max(w_bytes + io_bytes + work_bytes, 32 << 20),
                         _vmem_ceiling_bytes()))

    kernel = _make_kernel(packed["n_common"], packed["n_branch_layers"],
                          n_tasks, fuse_branches, n_w, packed["bias_offs"],
                          packed["lat_seg"], packed["so_seg"], compute_dtype)

    def _call(use_buffered):
        in_specs = [pl.BlockSpec((tb, input_dim), lambda i: (i, 0))]
        in_specs += [_resident_spec(w.shape, use_buffered) for w in weights]
        in_specs += [_resident_spec(bias.shape, use_buffered)]
        return pl.pallas_call(
            kernel, grid=grid, in_specs=in_specs, out_specs=out_specs,
            out_shape=out_shape, cost_estimate=cost,
            compiler_params=pltpu.CompilerParams(
                dimension_semantics=("parallel",),   # v7x: split batch over 2 TCs
                vmem_limit_bytes=vmem_limit),
        )(x_in, *weights, bias)

    try:
        latent_slab, head_slab = _call(True)
    except Exception:
        # Fallback: default (double) buffering of the resident weight blocks.
        latent_slab, head_slab = _call(False)

    meta = dict(latent_dim=packed["latent_dim"],
                latent_stride=packed["latent_stride"],
                head_stride=packed["head_stride"],
                offs=tuple(packed["offs"]),
                output_dims=tuple(output_dims))
    if return_slabs:
        return latent_slab[:B], head_slab[:B], meta

    ld = packed["latent_dim"]
    ls = packed["latent_stride"]
    hs = packed["head_stride"]
    offs = packed["offs"]
    latents = [latent_slab[:B, br * ls:br * ls + ld] for br in range(n_tasks)]
    outs = [[head_slab[:B, br * hs + offs[t]:br * hs + offs[t] + output_dims[t]]
             for t in range(n_tasks)] for br in range(n_tasks)]
    return latents, outs


# --------------------------------------------------------------------------
# Pure-JAX reference + test harness
# --------------------------------------------------------------------------
def _reference_forward(x, params, output_dims, compute_dtype=jnp.bfloat16):
    """Pure-JAX reference mirroring the PyTorch forward (same dot dtypes)."""
    def dense(h, w, b):
        return (jnp.dot(h.astype(compute_dtype), w.astype(compute_dtype),
                        preferred_element_type=jnp.float32)
                + jnp.reshape(b, (1, -1)).astype(jnp.float32))

    n_tasks = len(output_dims)
    h = x
    for (w, b) in params["common"]:
        h = jax.nn.relu(dense(h, w, b))
    nbl = len(params["branches"][0]) if n_tasks else 0
    latents = []
    for br in range(n_tasks):
        lat = h
        for j, (w, b) in enumerate(params["branches"][br]):
            lat = dense(lat, w, b)
            if j + 1 < nbl:
                lat = jax.nn.relu(lat)
        latents.append(lat)
    outs = []
    for br in range(n_tasks):
        act = jax.nn.relu(latents[br])
        outs.append([dense(act, w, b) for (w, b) in params["heads"][br]])
    return latents, outs


def _init_linear(key, in_dim, out_dim):
    kw, kb = jax.random.split(key)
    bound = 1.0 / jnp.sqrt(in_dim)
    w = jax.random.uniform(kw, (in_dim, out_dim), jnp.float32, -bound, bound)
    b = jax.random.uniform(kb, (1, out_dim), jnp.float32, -bound, bound)
    return w, b


def _build_params(key, input_dim, hidden_dims_common, hidden_dims_branches,
                  output_dims):
    n_tasks = len(output_dims)
    params = {"common": [], "branches": [], "heads": []}
    d = input_dim
    for hdim in hidden_dims_common:
        key, skey = jax.random.split(key)
        params["common"].append(_init_linear(skey, d, hdim))
        d = hdim
    common_out = d
    bd = common_out
    for _ in range(n_tasks):
        layers = []
        bd = common_out
        for hdim in hidden_dims_branches:
            key, skey = jax.random.split(key)
            layers.append(_init_linear(skey, bd, hdim))
            bd = hdim
        params["branches"].append(layers)
    branch_out = bd
    for _ in range(n_tasks):
        row = []
        for t in range(n_tasks):
            key, skey = jax.random.split(key)
            row.append(_init_linear(skey, branch_out, output_dims[t]))
        params["heads"].append(row)
    return params, key


def _run_and_check(x, params, output_dims, compute_dtype, out_dtype, tol):
    latents, outs = task_branches_forward(x, params, output_dims,
                                          compute_dtype=compute_dtype,
                                          out_dtype=out_dtype)
    jax.block_until_ready(latents)
    jax.block_until_ready(outs)
    ref_l, ref_o = _reference_forward(x, params, output_dims, compute_dtype)
    for a, r in zip(latents, ref_l):
        a32 = a.astype(jnp.float32)
        r32 = r.astype(out_dtype).astype(jnp.float32)
        assert jnp.allclose(a32, r32, atol=tol, rtol=tol), \
            float(jnp.max(jnp.abs(a32 - r32)))
    for row, rrow in zip(outs, ref_o):
        for a, r in zip(row, rrow):
            a32 = a.astype(jnp.float32)
            r32 = r.astype(out_dtype).astype(jnp.float32)
            assert jnp.allclose(a32, r32, atol=tol, rtol=tol), \
                float(jnp.max(jnp.abs(a32 - r32)))


if __name__ == "__main__":
    key = jax.random.PRNGKey(0)

    # ---- Config A: 2 tasks -> fused block-diagonal path ----
    input_dim_a = 32
    hidden_common_a = [64]
    hidden_branches_a = [48, 32]
    output_dims_a = [5, 3]
    batch_a = 8
    params_a, key = _build_params(key, input_dim_a, hidden_common_a,
                                  hidden_branches_a, output_dims_a)
    key, kx = jax.random.split(key)
    x_a = jax.random.normal(kx, (batch_a, input_dim_a), jnp.float32)

    # bf16 MXU dots + bf16 output slabs (default, bandwidth-optimal)
    _run_and_check(x_a, params_a, output_dims_a,
                   compute_dtype=jnp.bfloat16, out_dtype=jnp.bfloat16, tol=2e-2)
    # f32 path (parity with the f32 PyTorch module numerics)
    _run_and_check(x_a, params_a, output_dims_a,
                   compute_dtype=jnp.float32, out_dtype=jnp.float32, tol=1e-3)

    # ---- Config B: 4 tasks -> per-branch loop path (weights O(n_tasks)) ----
    input_dim_b = 24
    hidden_common_b = [32]
    hidden_branches_b = [16]
    output_dims_b = [3, 4, 2, 5]
    batch_b = 40
    params_b, key = _build_params(key, input_dim_b, hidden_common_b,
                                  hidden_branches_b, output_dims_b)
    key, kx = jax.random.split(key)
    x_b = jax.random.normal(kx, (batch_b, input_dim_b), jnp.float32)
    _run_and_check(x_b, params_b, output_dims_b,
                   compute_dtype=jnp.bfloat16, out_dtype=jnp.bfloat16, tol=2e-2)

    print("KERNEL_OK")
</pallas_src>

<mosaic_0001>
module attributes {stable_mosaic.version = 11 : i64} {
  func.func @kernel(%arg0: i32, %arg1: memref<16x32xf32, #tpu.memory_space<vmem>>, %arg2: memref<32x128xbf16, #tpu.memory_space<vmem>>, %arg3: memref<128x128xbf16, #tpu.memory_space<vmem>>, %arg4: memref<128x128xbf16, #tpu.memory_space<vmem>>, %arg5: memref<128x128xbf16, #tpu.memory_space<vmem>>, %arg6: memref<1x512xf32, #tpu.memory_space<vmem>>, %arg7: memref<16x128xbf16, #tpu.memory_space<vmem>>, %arg8: memref<16x128xbf16, #tpu.memory_space<vmem>>) attributes {dimension_semantics = [#tpu.dimension_semantics<parallel>], iteration_bounds = array<i64: 1>, scalar_prefetch = 0 : i64, scratch_operands = 0 : i64, tpu.core_type = #tpu.core_type<tc>, window_params = [{transform_indices = @transform_0, window_bounds = array<i64: 16, 32>}, {pipeline_mode = #tpu.pipeline_mode<synchronous>, transform_indices = @transform_1, window_bounds = array<i64: 32, 128>}, {pipeline_mode = #tpu.pipeline_mode<synchronous>, transform_indices = @transform_2, window_bounds = array<i64: 128, 128>}, {pipeline_mode = #tpu.pipeline_mode<synchronous>, transform_indices = @transform_3, window_bounds = array<i64: 128, 128>}, {pipeline_mode = #tpu.pipeline_mode<synchronous>, transform_indices = @transform_4, window_bounds = array<i64: 128, 128>}, {pipeline_mode = #tpu.pipeline_mode<synchronous>, transform_indices = @transform_5, window_bounds = array<i64: 1, 512>}, {transform_indices = @transform_6, window_bounds = array<i64: 16, 128>}, {transform_indices = @transform_7, window_bounds = array<i64: 16, 128>}]} {
    %c0 = arith.constant 0 : index
    %c0_0 = arith.constant 0 : index
    %0 = vector.load %arg1[%c0, %c0_0] : memref<16x32xf32, #tpu.memory_space<vmem>>, vector<16x32xf32>
    %c0_1 = arith.constant 0 : index
    %c0_2 = arith.constant 0 : index
    %1 = vector.load %arg2[%c0_1, %c0_2] : memref<32x128xbf16, #tpu.memory_space<vmem>>, vector<32x128xbf16>
    %2 = arith.truncf %0 : vector<16x32xf32> to vector<16x32xbf16>
    %cst = arith.constant dense<0.000000e+00> : vector<16x128xf32>
    %3 = tpu.matmul %2, %1, %cst {dimension_numbers = #tpu.dot_dimension_numbers<[1], [0], [0], [1], [0, 0, 1, 1], [], []>} : vector<16x32xbf16>, vector<32x128xbf16>, vector<16x128xf32> -> vector<16x128xf32>
    %c0_3 = arith.constant 0 : index
    %c0_4 = arith.constant 0 : index
    %4 = vector.load %arg6[%c0_3, %c0_4] : memref<1x512xf32, #tpu.memory_space<vmem>>, vector<1x128xf32>
    %5 = vector.broadcast %4 : vector<1x128xf32> to vector<16x128xf32>
    %6 = arith.addf %3, %5 : vector<16x128xf32>
    %cst_5 = arith.constant 0.000000e+00 : f32
    %7 = vector.broadcast %cst_5 : f32 to vector<16x128xf32>
    %8 = arith.maximumf %6, %7 : vector<16x128xf32>
    %c0_6 = arith.constant 0 : index
    %c0_7 = arith.constant 0 : index
    %9 = vector.load %arg3[%c0_6, %c0_7] : memref<128x128xbf16, #tpu.memory_space<vmem>>, vector<128x128xbf16>
    %10 = arith.truncf %8 : vector<16x128xf32> to vector<16x128xbf16>
    %cst_8 = arith.constant dense<0.000000e+00> : vector<16x128xf32>
    %11 = tpu.matmul %10, %9, %cst_8 {dimension_numbers = #tpu.dot_dimension_numbers<[1], [0], [0], [1], [0, 0, 1, 1], [], []>} : vector<16x128xbf16>, vector<128x128xbf16>, vector<16x128xf32> -> vector<16x128xf32>
    %c0_9 = arith.constant 0 : index
    %c128 = arith.constant 128 : index
    %12 = vector.load %arg6[%c0_9, %c128] : memref<1x512xf32, #tpu.memory_space<vmem>>, vector<1x128xf32>
    %13 = vector.broadcast %12 : vector<1x128xf32> to vector<16x128xf32>
    %14 = arith.addf %11, %13 : vector<16x128xf32>
    %cst_10 = arith.constant 0.000000e+00 : f32
    %15 = vector.broadcast %cst_10 : f32 to vector<16x128xf32>
    %16 = arith.maximumf %14, %15 : vector<16x128xf32>
    %c0_11 = arith.constant 0 : index
    %c0_12 = arith.constant 0 : index
    %17 = vector.load %arg4[%c0_11, %c0_12] : memref<128x128xbf16, #tpu.memory_space<vmem>>, vector<128x128xbf16>
    %18 = arith.truncf %16 : vector<16x128xf32> to vector<16x128xbf16>
    %cst_13 = arith.constant dense<0.000000e+00> : vector<16x128xf32>
    %19 = tpu.matmul %18, %17, %cst_13 {dimension_numbers = #tpu.dot_dimension_numbers<[1], [0], [0], [1], [0, 0, 1, 1], [], []>} : vector<16x128xbf16>, vector<128x128xbf16>, vector<16x128xf32> -> vector<16x128xf32>
    %c0_14 = arith.constant 0 : index
    %c256 = arith.constant 256 : index
    %20 = vector.load %arg6[%c0_14, %c256] : memref<1x512xf32, #tpu.memory_space<vmem>>, vector<1x128xf32>
    %21 = vector.broadcast %20 : vector<1x128xf32> to vector<16x128xf32>
    %22 = arith.addf %19, %21 : vector<16x128xf32>
    %23 = arith.truncf %22 : vector<16x128xf32> to vector<16x128xbf16>
    %c0_15 = arith.constant 0 : index
    %c0_16 = arith.constant 0 : index
    %24 = vector.load %arg7[%c0_15, %c0_16] : memref<16x128xbf16, #tpu.memory_space<vmem>>, vector<16x128xbf16>
    tpu.vector_store %arg7[%c0_15, %c0_16], %23 {strides = array<i32>} : memref<16x128xbf16, #tpu.memory_space<vmem>>, vector<16x128xbf16>,
    %cst_17 = arith.constant 0.000000e+00 : f32
    %25 = vector.broadcast %cst_17 : f32 to vector<16x128xf32>
    %26 = arith.maximumf %22, %25 : vector<16x128xf32>
    %c0_18 = arith.constant 0 : index
    %c0_19 = arith.constant 0 : index
    %27 = vector.load %arg5[%c0_18, %c0_19] : memref<128x128xbf16, #tpu.memory_space<vmem>>, vector<128x128xbf16>
    %28 = arith.truncf %26 : vector<16x128xf32> to vector<16x128xbf16>
    %cst_20 = arith.constant dense<0.000000e+00> : vector<16x128xf32>
    %29 = tpu.matmul %28, %27, %cst_20 {dimension_numbers = #tpu.dot_dimension_numbers<[1], [0], [0], [1], [0, 0, 1, 1], [], []>} : vector<16x128xbf16>, vector<128x128xbf16>, vector<16x128xf32> -> vector<16x128xf32>
    %c0_21 = arith.constant 0 : index
    %c384 = arith.constant 384 : index
    %30 = vector.load %arg6[%c0_21, %c384] : memref<1x512xf32, #tpu.memory_space<vmem>>, vector<1x128xf32>
    %31 = vector.broadcast %30 : vector<1x128xf32> to vector<16x128xf32>
    %32 = arith.addf %29, %31 : vector<16x128xf32>
    %33 = arith.truncf %32 : vector<16x128xf32> to vector<16x128xbf16>
    %c0_22 = arith.constant 0 : index
    %c0_23 = arith.constant 0 : index
    %34 = vector.load %arg8[%c0_22, %c0_23] : memref<16x128xbf16, #tpu.memory_space<vmem>>, vector<16x128xbf16>
    tpu.vector_store %arg8[%c0_22, %c0_23], %33 {strides = array<i32>} : memref<16x128xbf16, #tpu.memory_space<vmem>>, vector<16x128xbf16>,
    return
  }
  func.func @transform_0(%arg0: i32) -> (i32, i32) {
    %c0_i32 = arith.constant 0 : i32
    %c0_i32_0 = arith.constant 0 : i32
    return %arg0, %c0_i32 : i32, i32
  }
  func.func @transform_1(%arg0: i32) -> (i32, i32) {
    %c0_i32 = arith.constant 0 : i32
    %c0_i32_0 = arith.constant 0 : i32
    %c0_i32_1 = arith.constant 0 : i32
    return %c0_i32, %c0_i32_0 : i32, i32
  }
  func.func @transform_2(%arg0: i32) -> (i32, i32) {
    %c0_i32 = arith.constant 0 : i32
    %c0_i32_0 = arith.constant 0 : i32
    %c0_i32_1 = arith.constant 0 : i32
    return %c0_i32, %c0_i32_0 : i32, i32
  }
  func.func @transform_3(%arg0: i32) -> (i32, i32) {
    %c0_i32 = arith.constant 0 : i32
    %c0_i32_0 = arith.constant 0 : i32
    %c0_i32_1 = arith.constant 0 : i32
    return %c0_i32, %c0_i32_0 : i32, i32
  }
  func.func @transform_4(%arg0: i32) -> (i32, i32) {
    %c0_i32 = arith.constant 0 : i32
    %c0_i32_0 = arith.constant 0 : i32
    %c0_i32_1 = arith.constant 0 : i32
    return %c0_i32, %c0_i32_0 : i32, i32
  }
  func.func @transform_5(%arg0: i32) -> (i32, i32) {
    %c0_i32 = arith.constant 0 : i32
    %c0_i32_0 = arith.constant 0 : i32
    %c0_i32_1 = arith.constant 0 : i32
    return %c0_i32, %c0_i32_0 : i32, i32
  }
  func.func @transform_6(%arg0: i32) -> (i32, i32) {
    %c0_i32 = arith.constant 0 : i32
    %c0_i32_0 = arith.constant 0 : i32
    return %arg0, %c0_i32 : i32, i32
  }
  func.func @transform_7(%arg0: i32) -> (i32, i32) {
    %c0_i32 = arith.constant 0 : i32
    %c0_i32_0 = arith.constant 0 : i32
    return %arg0, %c0_i32 : i32, i32
  }
}

module attributes {stable_mosaic.version = 11 : i64} {
  func.func @kernel(%arg0: i32, %arg1: memref<16x32xf32, #tpu.memory_space<vmem>>, %arg2: memref<32x128xbf16, #tpu.memory_space<vmem>>, %arg3: memref<128x128xbf16, #tpu.memory_space<vmem>>, %arg4: memref<128x128xbf16, #tpu.memory_space<vmem>>, %arg5: memref<128x128xbf16, #tpu.memory_space<vmem>>, %arg6: memref<1x512xf32, #tpu.memory_space<vmem>>, %arg7: memref<16x128xbf16, #tpu.memory_space<vmem>>, %arg8: memref<16x128xbf16, #tpu.memory_space<vmem>>) attributes {dimension_semantics = [#tpu.dimension_semantics<parallel>], iteration_bounds = array<i64: 1>, scalar_prefetch = 0 : i64, scratch_operands = 0 : i64, tpu.core_type = #tpu.core_type<tc>, window_params = [{transform_indices = @transform_0, window_bounds = array<i64: 16, 32>}, {pipeline_mode = #tpu.pipeline_mode<synchronous>, transform_indices = @transform_1, window_bounds = array<i64: 32, 128>}, {pipeline_mode = #tpu.pipeline_mode<synchronous>, transform_indices = @transform_2, window_bounds = array<i64: 128, 128>}, {pipeline_mode = #tpu.pipeline_mode<synchronous>, transform_indices = @transform_3, window_bounds = array<i64: 128, 128>}, {pipeline_mode = #tpu.pipeline_mode<synchronous>, transform_indices = @transform_4, window_bounds = array<i64: 128, 128>}, {pipeline_mode = #tpu.pipeline_mode<synchronous>, transform_indices = @transform_5, window_bounds = array<i64: 1, 512>}, {transform_indices = @transform_6, window_bounds = array<i64: 16, 128>}, {transform_indices = @transform_7, window_bounds = array<i64: 16, 128>}]} {
    %c0 = arith.constant 0 : index
    %c0_0 = arith.constant 0 : index
    %0 = vector.load %arg1[%c0, %c0_0] : memref<16x32xf32, #tpu.memory_space<vmem>>, vector<16x32xf32>
    %c0_1 = arith.constant 0 : index
    %c0_2 = arith.constant 0 : index
    %1 = vector.load %arg2[%c0_1, %c0_2] : memref<32x128xbf16, #tpu.memory_space<vmem>>, vector<32x128xbf16>
    %2 = arith.truncf %0 : vector<16x32xf32> to vector<16x32xbf16>
    %cst = arith.constant dense<0.000000e+00> : vector<16x128xf32>
    %3 = tpu.matmul %2, %1, %cst {dimension_numbers = #tpu.dot_dimension_numbers<[1], [0], [0], [1], [0, 0, 1, 1], [], []>} : vector<16x32xbf16>, vector<32x128xbf16>, vector<16x128xf32> -> vector<16x128xf32>
    %c0_3 = arith.constant 0 : index
    %c0_4 = arith.constant 0 : index
    %4 = vector.load %arg6[%c0_3, %c0_4] : memref<1x512xf32, #tpu.memory_space<vmem>>, vector<1x128xf32>
    %5 = vector.broadcast %4 : vector<1x128xf32> to vector<16x128xf32>
    %6 = arith.addf %3, %5 : vector<16x128xf32>
    %cst_5 = arith.constant 0.000000e+00 : f32
    %7 = vector.broadcast %cst_5 : f32 to vector<16x128xf32>
    %8 = arith.maximumf %6, %7 : vector<16x128xf32>
    %c0_6 = arith.constant 0 : index
    %c0_7 = arith.constant 0 : index
    %9 = vector.load %arg3[%c0_6, %c0_7] : memref<128x128xbf16, #tpu.memory_space<vmem>>, vector<128x128xbf16>
    %10 = arith.truncf %8 : vector<16x128xf32> to vector<16x128xbf16>
    %cst_8 = arith.constant dense<0.000000e+00> : vector<16x128xf32>
    %11 = tpu.matmul %10, %9, %cst_8 {dimension_numbers = #tpu.dot_dimension_numbers<[1], [0], [0], [1], [0, 0, 1, 1], [], []>} : vector<16x128xbf16>, vector<128x128xbf16>, vector<16x128xf32> -> vector<16x128xf32>
    %c0_9 = arith.constant 0 : index
    %c128 = arith.constant 128 : index
    %12 = vector.load %arg6[%c0_9, %c128] : memref<1x512xf32, #tpu.memory_space<vmem>>, vector<1x128xf32>
    %13 = vector.broadcast %12 : vector<1x128xf32> to vector<16x128xf32>
    %14 = arith.addf %11, %13 : vector<16x128xf32>
    %cst_10 = arith.constant 0.000000e+00 : f32
    %15 = vector.broadcast %cst_10 : f32 to vector<16x128xf32>
    %16 = arith.maximumf %14, %15 : vector<16x128xf32>
    %c0_11 = arith.constant 0 : index
    %c0_12 = arith.constant 0 : index
    %17 = vector.load %arg4[%c0_11, %c0_12] : memref<128x128xbf16, #tpu.memory_space<vmem>>, vector<128x128xbf16>
    %18 = arith.truncf %16 : vector<16x128xf32> to vector<16x128xbf16>
    %cst_13 = arith.constant dense<0.000000e+00> : vector<16x128xf32>
    %19 = tpu.matmul %18, %17, %cst_13 {dimension_numbers = #tpu.dot_dimension_numbers<[1], [0], [0], [1], [0, 0, 1, 1], [], []>} : vector<16x128xbf16>, vector<128x128xbf16>, vector<16x128xf32> -> vector<16x128xf32>
    %c0_14 = arith.constant 0 : index
    %c256 = arith.constant 256 : index
    %20 = vector.load %arg6[%c0_14, %c256] : memref<1x512xf32, #tpu.memory_space<vmem>>, vector<1x128xf32>
    %21 = vector.broadcast %20 : vector<1x128xf32> to vector<16x128xf32>
    %22 = arith.addf %19, %21 : vector<16x128xf32>
    %23 = arith.truncf %22 : vector<16x128xf32> to vector<16x128xbf16>
    %c0_15 = arith.constant 0 : index
    %c0_16 = arith.constant 0 : index
    %24 = vector.load %arg7[%c0_15, %c0_16] : memref<16x128xbf16, #tpu.memory_space<vmem>>, vector<16x128xbf16>
    tpu.vector_store %arg7[%c0_15, %c0_16], %23 {strides = array<i32>} : memref<16x128xbf16, #tpu.memory_space<vmem>>, vector<16x128xbf16>,
    %cst_17 = arith.constant 0.000000e+00 : f32
    %25 = vector.broadcast %cst_17 : f32 to vector<16x128xf32>
    %26 = arith.maximumf %22, %25 : vector<16x128xf32>
    %c0_18 = arith.constant 0 : index
    %c0_19 = arith.constant 0 : index
    %27 = vector.load %arg5[%c0_18, %c0_19] : memref<128x128xbf16, #tpu.memory_space<vmem>>, vector<128x128xbf16>
    %28 = arith.truncf %26 : vector<16x128xf32> to vector<16x128xbf16>
    %cst_20 = arith.constant dense<0.000000e+00> : vector<16x128xf32>
    %29 = tpu.matmul %28, %27, %cst_20 {dimension_numbers = #tpu.dot_dimension_numbers<[1], [0], [0], [1], [0, 0, 1, 1], [], []>} : vector<16x128xbf16>, vector<128x128xbf16>, vector<16x128xf32> -> vector<16x128xf32>
    %c0_21 = arith.constant 0 : index
    %c384 = arith.constant 384 : index
    %30 = vector.load %arg6[%c0_21, %c384] : memref<1x512xf32, #tpu.memory_space<vmem>>, vector<1x128xf32>
    %31 = vector.broadcast %30 : vector<1x128xf32> to vector<16x128xf32>
    %32 = arith.addf %29, %31 : vector<16x128xf32>
    %33 = arith.truncf %32 : vector<16x128xf32> to vector<16x128xbf16>
    %c0_22 = arith.constant 0 : index
    %c0_23 = arith.constant 0 : index
    %34 = vector.load %arg8[%c0_22, %c0_23] : memref<16x128xbf16, #tpu.memory_space<vmem>>, vector<16x128xbf16>
    tpu.vector_store %arg8[%c0_22, %c0_23], %33 {strides = array<i32>} : memref<16x128xbf16, #tpu.memory_space<vmem>>, vector<16x128xbf16>,
    return
  }
  func.func @transform_0(%arg0: i32) -> (i32, i32) {
    %c0_i32 = arith.constant 0 : i32
    %c0_i32_0 = arith.constant 0 : i32
    return %arg0, %c0_i32 : i32, i32
  }
  func.func @transform_1(%arg0: i32) -> (i32, i32) {
    %c0_i32 = arith.constant 0 : i32
    %c0_i32_0 = arith.constant 0 : i32
    %c0_i32_1 = arith.constant 0 : i32
    return %c0_i32, %c0_i32_0 : i32, i32
  }
  func.func @transform_2(%arg0: i32) -> (i32, i32) {
    %c0_i32 = arith.constant 0 : i32
    %c0_i32_0 = arith.constant 0 : i32
    %c0_i32_1 = arith.constant 0 : i32
    return %c0_i32, %c0_i32_0 : i32, i32
  }
  func.func @transform_3(%arg0: i32) -> (i32, i32) {
    %c0_i32 = arith.constant 0 : i32
    %c0_i32_0 = arith.constant 0 : i32
    %c0_i32_1 = arith.constant 0 : i32
    return %c0_i32, %c0_i32_0 : i32, i32
  }
  func.func @transform_4(%arg0: i32) -> (i32, i32) {
    %c0_i32 = arith.constant 0 : i32
    %c0_i32_0 = arith.constant 0 : i32
    %c0_i32_1 = arith.constant 0 : i32
    return %c0_i32, %c0_i32_0 : i32, i32
  }
  func.func @transform_5(%arg0: i32) -> (i32, i32) {
    %c0_i32 = arith.constant 0 : i32
    %c0_i32_0 = arith.constant 0 : i32
    %c0_i32_1 = arith.constant 0 : i32
    return %c0_i32, %c0_i32_0 : i32, i32
  }
  func.func @transform_6(%arg0: i32) -> (i32, i32) {
    %c0_i32 = arith.constant 0 : i32
    %c0_i32_0 = arith.constant 0 : i32
    return %arg0, %c0_i32 : i32, i32
  }
  func.func @transform_7(%arg0: i32) -> (i32, i32) {
    %c0_i32 = arith.constant 0 : i32
    %c0_i32_0 = arith.constant 0 : i32
    return %arg0, %c0_i32 : i32, i32
  }
}

</mosaic_0001>

<llo_original>
// kernel: tpu_custom_call.1
$region0: #{tpu_custom_call.1}
  #allocation0 [shape = 'u32[]', space=smem, size = 0x4, offset = 0x4, fixed_abs, tag = 'smem constant byte address 0x4 - core index']
  #allocation1 [shape = 'u32[72,128]{1,0:T(1,128)}', space=vmem, size = 0x9000, scoped, tag = 'internal scratch']
  %s0 = inlined_call_operand.hbm [shape: f32[16,32], index: 0, kind: input, shape index: {}]
  %s1 = inlined_call_operand.hbm [shape: bf16[32,128], index: 1, kind: input, shape index: {}]
  %s2 = inlined_call_operand.hbm [shape: bf16[128,128], index: 2, kind: input, shape index: {}]
  %s3 = inlined_call_operand.hbm [shape: bf16[128,128], index: 3, kind: input, shape index: {}]
  %s4 = inlined_call_operand.hbm [shape: bf16[128,128], index: 4, kind: input, shape index: {}]
  %s5 = inlined_call_operand.vmem [shape: f32[1,512], index: 5, kind: input, shape index: {}]
  %s6 = inlined_call_operand.hbm [shape: bf16[16,128], index: 6, kind: output, shape index: {0}]
  %s7 = inlined_call_operand.hbm [shape: bf16[16,128], index: 7, kind: output, shape index: {1}]
  %8 = xla_tuple %s6, %s7
  %s9 = sld [smem:[#allocation0]]
  $region62: #{tpu_custom_call.1} parent=0
    _
  %s11 = ssub.s32 1, %s9
  %s12 = scalar_select 0, %s11, %s9
  $region1: #{tpu_custom_call.1} parent=0
    #allocation2 [shape = 'u8[8192]{0}', space=vmem, size = 0x2000, scoped, tag = 'input window, operand 0, single buffered']
    #allocation3 [shape = 's32[1]{0}', space=sflag, size = 0x4, scoped, tag = 'scoped memory for tpu_custom_call.1']
    #allocation4 [shape = 's32[1]{0}', space=sflag, size = 0x4, scoped, tag = 'scoped memory for tpu_custom_call.1']
    #allocation5 [shape = 'u8[8192]{0}', space=vmem, size = 0x2000, scoped, tag = 'input window, operand 1, single buffered']
    #allocation6 [shape = 's32[1]{0}', space=sflag, size = 0x4, scoped, tag = 'scoped memory for tpu_custom_call.1']
    #allocation7 [shape = 'u8[32768]{0}', space=vmem, size = 0x8000, scoped, tag = 'input window, operand 2, single buffered']
    #allocation8 [shape = 'u8[32768]{0}', space=vmem, size = 0x8000, scoped, tag = 'input window, operand 3, single buffered']
    #allocation9 [shape = 's32[1]{0}', space=sflag, size = 0x4, scoped, tag = 'scoped memory for tpu_custom_call.1']
    #allocation10 [shape = 'u8[32768]{0}', space=vmem, size = 0x8000, scoped, tag = 'input window, operand 4, single buffered']
    #allocation11 [shape = 'u8[4096]{0}', space=vmem, size = 0x1000, scoped, tag = 'output window, operand 0, single buffered']
    #allocation12 [shape = 'u8[4096]{0}', space=vmem, size = 0x1000, scoped, tag = 'output window, operand 1, single buffered']
    #allocation13 [shape = 's32[1]{0}', space=sflag, size = 0x4, scoped, tag = 'scoped memory for tpu_custom_call.1']
    %13 = vsyncpa [#allocation3], 0
    %14 = vsyncpa [#allocation6], 0
    %15 = vsyncpa [#allocation9], 0
    %16 = vsyncpa [#allocation4], 0
    %17 = vsyncpa [#allocation13], 0
    // Predicated region
    $region2: #{tpu_custom_call.1} parent=1 // pred_check
      _
    $region3: #{tpu_custom_call.1} parent=1 // pred_check_branch
      %19 = sbr.rel (0) target = $region5
    $region4: #{tpu_custom_call.1} parent=1 // pred_region
      %21 = vsyncadd [#allocation3], 0
      %s22 = sshll.u32 %s0, 4
      %s23 = int_to_ptr.hbm [resolvable:$true] %s22
      %s24 = sshll.u32 [#allocation2], 4
      %s25 = int_to_ptr.vmem [resolvable:$true] %s24
      %30 = dma.hbm_to_vmem [thread:$0]  %s23, 256, %s25, [#allocation3], 128, 128, 8
    $region5: #{tpu_custom_call.1} parent=1 // pred_fallthru
      _
    // Predicated region
    $region6: #{tpu_custom_call.1} parent=1 // pred_check
      _
    $region7: #{tpu_custom_call.1} parent=1 // pred_check_branch
      %32 = sbr.rel (0) target = $region9
    $region8: #{tpu_custom_call.1} parent=1 // pred_region
      %34 = vsyncadd [#allocation6], 0
      %s35 = sshll.u32 %s1, 4
      %s36 = int_to_ptr.hbm [resolvable:$true] %s35
      %s37 = sshll.u32 [#allocation5], 4
      %s38 = int_to_ptr.vmem [resolvable:$true] %s37
      %43 = dma.hbm_to_vmem [thread:$0]  %s36, 256, %s38, [#allocation6], 64, 64, 4
    $region9: #{tpu_custom_call.1} parent=1 // pred_fallthru
      _
    // Predicated region
    $region10: #{tpu_custom_call.1} parent=1 // pred_check
      _
    $region11: #{tpu_custom_call.1} parent=1 // pred_check_branch
      %45 = sbr.rel (0) target = $region13
    $region12: #{tpu_custom_call.1} parent=1 // pred_region
      %47 = vsyncadd [#allocation6], 0
      %s48 = sshll.u32 %s2, 4
      %s49 = int_to_ptr.hbm [resolvable:$true] %s48
      %s50 = sshll.u32 [#allocation7], 4
      %s51 = int_to_ptr.vmem [resolvable:$true] %s50
      %56 = dma.hbm_to_vmem [thread:$0]  %s49, 1024, %s51, [#allocation6], 64, 64, 4
    $region13: #{tpu_custom_call.1} parent=1 // pred_fallthru
      _
    // Predicated region
    $region14: #{tpu_custom_call.1} parent=1 // pred_check
      _
    $region15: #{tpu_custom_call.1} parent=1 // pred_check_branch
      %58 = sbr.rel (0) target = $region17
    $region16: #{tpu_custom_call.1} parent=1 // pred_region
      %60 = vsyncadd [#allocation9], 0
      %s61 = sshll.u32 %s3, 4
      %s62 = int_to_ptr.hbm [resolvable:$true] %s61
      %s63 = sshll.u32 [#allocation8], 4
      %s64 = int_to_ptr.vmem [resolvable:$true] %s63
      %69 = dma.hbm_to_vmem [thread:$0]  %s62, 1024, %s64, [#allocation9], 64, 64, 4
    $region17: #{tpu_custom_call.1} parent=1 // pred_fallthru
      _
    // Predicated region
    $region18: #{tpu_custom_call.1} parent=1 // pred_check
      _
    $region19: #{tpu_custom_call.1} parent=1 // pred_check_branch
      %71 = sbr.rel (0) target = $region21
    $region20: #{tpu_custom_call.1} parent=1 // pred_region
      %73 = vsyncadd [#allocation9], 0
      %s74 = sshll.u32 %s4, 4
      %s75 = int_to_ptr.hbm [resolvable:$true] %s74
      %s76 = sshll.u32 [#allocation10], 4
      %s77 = int_to_ptr.vmem [resolvable:$true] %s76
      %82 = dma.hbm_to_vmem [thread:$0]  %s75, 1024, %s77, [#allocation9], 64, 64, 4
    $region21: #{tpu_custom_call.1} parent=1 // pred_fallthru
      _
    // Predicated region
    $region22: #{tpu_custom_call.1} parent=1 // pred_check
      _
    $region23: #{tpu_custom_call.1} parent=1 // pred_check_branch
      %84 = sbr.rel (0) target = $region25
    $region24: #{tpu_custom_call.1} parent=1 // pred_region
      _
    $region25: #{tpu_custom_call.1} parent=1 // pred_fallthru
      _
    // Predicated region
    $region26: #{tpu_custom_call.1} parent=1 // pred_check
      _
    $region27: #{tpu_custom_call.1} parent=1 // pred_check_branch
      %86 = sbr.rel (0) target = $region29
    $region28: #{tpu_custom_call.1} parent=1 // pred_region
      %88 = dma.done [#allocation3], 256
    $region29: #{tpu_custom_call.1} parent=1 // pred_fallthru
      _
    // Predicated region
    $region30: #{tpu_custom_call.1} parent=1 // pred_check
      _
    $region31: #{tpu_custom_call.1} parent=1 // pred_check_branch
      %90 = sbr.rel (0) target = $region33
    $region32: #{tpu_custom_call.1} parent=1 // pred_region
      %92 = dma.done [#allocation6], 256
    $region33: #{tpu_custom_call.1} parent=1 // pred_fallthru
      _
    // Predicated region
    $region34: #{tpu_custom_call.1} parent=1 // pred_check
      _
    $region35: #{tpu_custom_call.1} parent=1 // pred_check_branch
      %94 = sbr.rel (0) target = $region37
    $region36: #{tpu_custom_call.1} parent=1 // pred_region
      %96 = dma.done [#allocation6], 1024
    $region37: #{tpu_custom_call.1} parent=1 // pred_fallthru
      _
    // Predicated region
    $region38: #{tpu_custom_call.1} parent=1 // pred_check
      _
    $region39: #{tpu_custom_call.1} parent=1 // pred_check_branch
      %98 = sbr.rel (0) target = $region41
    $region40: #{tpu_custom_call.1} parent=1 // pred_region
      %100 = dma.done [#allocation9], 1024
    $region41: #{tpu_custom_call.1} parent=1 // pred_fallthru
      _
    // Predicated region
    $region42: #{tpu_custom_call.1} parent=1 // pred_check
      _
    $region43: #{tpu_custom_call.1} parent=1 // pred_check_branch
      %102 = sbr.rel (0) target = $region45
    $region44: #{tpu_custom_call.1} parent=1 // pred_region
      %104 = dma.done [#allocation9], 1024
    $region45: #{tpu_custom_call.1} parent=1 // pred_fallthru
      _
    %v106 = vld [vmem:[#allocation2] sm:$0xff]
    %v107 = vld [vmem:[#allocation2 + $0x8] sm:$0xff]
    %v108 = vld [vmem:[#allocation5] sm:$0xf]
    %v109 = vld [vmem:[#allocation5 + $0x4] sm:$0xf]
    %v110 = vld [vmem:[#allocation5 + $0x8] sm:$0xf]
    %v111 = vld [vmem:[#allocation5 + $0xc] sm:$0xf]
    %v112 = vpack.c.bf16 %v107, %v106
    %v113 = vld [vmem:[%s5] sm:$0x1]
    %v115 = vperm.slane %v113, 0
    %v121 = vunpack.c.l.b16 %v108
    %v122 = vunpack.c.l.b16 %v109
    %v123 = vunpack.c.l.b16 %v110
    %v124 = vunpack.c.l.b16 %v111
    %v125 = vpack.c.b16 %v122, %v121
    %v126 = vpack.c.b16 %v124, %v123
    %vm129 = vcmask 261120
    %v131 = vsel %vm129, %v112, 0
    %133 = vmatpush.bf16.msra.mxu0 0
    %134 = vmatpush.bf16.msra.mxu0 0
    %135 = vmatpush.bf16.msra.mxu0 0
    %136 = vmatpush.bf16.msra.mxu0 0
    %137 = vmatpush.bf16.msra.mxu0 0
    %138 = vmatpush.bf16.msra.mxu0 0
    %139 = vmatpush.bf16.msra.mxu0 %v126
    %140 = vmatpush.bf16.msra.mxu0 %v125
    %141 = vmatmul.bf16.gmra.mxu0 %v131
    %v142 = vpop.f32.mrf.mxu0
    %v143 = vadd.f32 %v115, %v142
    %v144 = vpop.f32.mrf.mxu0
    %v145 = vadd.f32 %v115, %v144
    %146 = vdwg.mxu0
    %v147 = vmax.f32 %v143, 0.0
    %v148 = vmax.f32 %v145, 0.0
    %v149 = vld [vmem:[#allocation7] sm:$0xf]
    %v150 = vld [vmem:[#allocation7 + $0x4] sm:$0xf]
    %v151 = vld [vmem:[#allocation7 + $0x8] sm:$0xf]
    %v152 = vld [vmem:[#allocation7 + $0xc] sm:$0xf]
    %v153 = vld [vmem:[#allocation7 + $0x10] sm:$0xf]
    %v154 = vld [vmem:[#allocation7 + $0x14] sm:$0xf]
    %v155 = vld [vmem:[#allocation7 + $0x18] sm:$0xf]
    %v156 = vld [vmem:[#allocation7 + $0x1c] sm:$0xf]
    %v157 = vld [vmem:[#allocation7 + $0x20] sm:$0xf]
    %v158 = vld [vmem:[#allocation7 + $0x24] sm:$0xf]
    %v159 = vld [vmem:[#allocation7 + $0x28] sm:$0xf]
    %v160 = vld [vmem:[#allocation7 + $0x2c] sm:$0xf]
    %v161 = vld [vmem:[#allocation7 + $0x30] sm:$0xf]
    %v162 = vld [vmem:[#allocation7 + $0x34] sm:$0xf]
    %v163 = vld [vmem:[#allocation7 + $0x38] sm:$0xf]
    %v164 = vld [vmem:[#allocation7 + $0x3c] sm:$0xf]
    %v165 = vpack.c.bf16 %v148, %v147
    %v166 = vld [vmem:[%s5 + $0x1] sm:$0x1]
    %v168 = vperm.slane %v166, 0
    %v186 = vunpack.c.l.b16 %v149
    %v187 = vunpack.c.l.b16 %v150
    %v188 = vunpack.c.l.b16 %v151
    %v189 = vunpack.c.l.b16 %v152
    %v190 = vunpack.c.l.b16 %v153
    %v191 = vunpack.c.l.b16 %v154
    %v192 = vunpack.c.l.b16 %v155
    %v193 = vunpack.c.l.b16 %v156
    %v194 = vunpack.c.l.b16 %v157
    %v195 = vunpack.c.l.b16 %v158
    %v196 = vunpack.c.l.b16 %v159
    %v197 = vunpack.c.l.b16 %v160
    %v198 = vunpack.c.l.b16 %v161
    %v199 = vunpack.c.l.b16 %v162
    %v200 = vunpack.c.l.b16 %v163
    %v201 = vunpack.c.l.b16 %v164
    %v202 = vpack.c.b16 %v187, %v186
    %v203 = vpack.c.b16 %v189, %v188
    %v204 = vpack.c.b16 %v191, %v190
    %v205 = vpack.c.b16 %v193, %v192
    %v206 = vpack.c.b16 %v195, %v194
    %v207 = vpack.c.b16 %v197, %v196
    %v208 = vpack.c.b16 %v199, %v198
    %v209 = vpack.c.b16 %v201, %v200
    %218 = vmatpush.bf16.msra.mxu0 %v209
    %219 = vmatpush.bf16.msra.mxu0 %v208
    %220 = vmatpush.bf16.msra.mxu0 %v207
    %221 = vmatpush.bf16.msra.mxu0 %v206
    %222 = vmatpush.bf16.msra.mxu0 %v205
    %223 = vmatpush.bf16.msra.mxu0 %v204
    %224 = vmatpush.bf16.msra.mxu0 %v203
    %225 = vmatpush.bf16.msra.mxu0 %v202
    %226 = vmatmul.bf16.gmra.mxu0 %v165
    %v227 = vpop.f32.mrf.mxu0
    %v228 = vadd.f32 %v168, %v227
    %v229 = vpop.f32.mrf.mxu0
    %v230 = vadd.f32 %v168, %v229
    %231 = vdwg.mxu0
    %v232 = vmax.f32 %v228, 0.0
    %v233 = vmax.f32 %v230, 0.0
    %v234 = vld [vmem:[#allocation8] sm:$0xf]
    %v235 = vld [vmem:[#allocation8 + $0x4] sm:$0xf]
    %v236 = vld [vmem:[#allocation8 + $0x8] sm:$0xf]
    %v237 = vld [vmem:[#allocation8 + $0xc] sm:$0xf]
    %v238 = vld [vmem:[#allocation8 + $0x10] sm:$0xf]
    %v239 = vld [vmem:[#allocation8 + $0x14] sm:$0xf]
    %v240 = vld [vmem:[#allocation8 + $0x18] sm:$0xf]
    %v241 = vld [vmem:[#allocation8 + $0x1c] sm:$0xf]
    %v242 = vld [vmem:[#allocation8 + $0x20] sm:$0xf]
    %v243 = vld [vmem:[#allocation8 + $0x24] sm:$0xf]
    %v244 = vld [vmem:[#allocation8 + $0x28] sm:$0xf]
    %v245 = vld [vmem:[#allocation8 + $0x2c] sm:$0xf]
    %v246 = vld [vmem:[#allocation8 + $0x30] sm:$0xf]
    %v247 = vld [vmem:[#allocation8 + $0x34] sm:$0xf]
    %v248 = vld [vmem:[#allocation8 + $0x38] sm:$0xf]
    %v249 = vld [vmem:[#allocation8 + $0x3c] sm:$0xf]
    %v250 = vpack.c.bf16 %v233, %v232
    %v251 = vld [vmem:[%s5 + $0x2] sm:$0x1]
    %v253 = vperm.slane %v251, 0
    %v271 = vunpack.c.l.b16 %v234
    %v272 = vunpack.c.l.b16 %v235
    %v273 = vunpack.c.l.b16 %v236
    %v274 = vunpack.c.l.b16 %v237
    %v275 = vunpack.c.l.b16 %v238
    %v276 = vunpack.c.l.b16 %v239
    %v277 = vunpack.c.l.b16 %v240
    %v278 = vunpack.c.l.b16 %v241
    %v279 = vunpack.c.l.b16 %v242
    %v280 = vunpack.c.l.b16 %v243
    %v281 = vunpack.c.l.b16 %v244
    %v282 = vunpack.c.l.b16 %v245
    %v283 = vunpack.c.l.b16 %v246
    %v284 = vunpack.c.l.b16 %v247
    %v285 = vunpack.c.l.b16 %v248
    %v286 = vunpack.c.l.b16 %v249
    %v287 = vpack.c.b16 %v272, %v271
    %v288 = vpack.c.b16 %v274, %v273
    %v289 = vpack.c.b16 %v276, %v275
    %v290 = vpack.c.b16 %v278, %v277
    %v291 = vpack.c.b16 %v280, %v279
    %v292 = vpack.c.b16 %v282, %v281
    %v293 = vpack.c.b16 %v284, %v283
    %v294 = vpack.c.b16 %v286, %v285
    %303 = vmatpush.bf16.msra.mxu0 %v294
    %304 = vmatpush.bf16.msra.mxu0 %v293
    %305 = vmatpush.bf16.msra.mxu0 %v292
    %306 = vmatpush.bf16.msra.mxu0 %v291
    %307 = vmatpush.bf16.msra.mxu0 %v290
    %308 = vmatpush.bf16.msra.mxu0 %v289
    %309 = vmatpush.bf16.msra.mxu0 %v288
    %310 = vmatpush.bf16.msra.mxu0 %v287
    %311 = vmatmul.bf16.gmra.mxu0 %v250
    %v312 = vpop.f32.mrf.mxu0
    %v313 = vadd.f32 %v253, %v312
    %v314 = vpop.f32.mrf.mxu0
    %v315 = vadd.f32 %v253, %v314
    %316 = vdwg.mxu0
    %v317 = vpack.c.bf16 %v313, %v313
    %v318 = vpack.c.bf16 %v315, %v315
    %319 = vst [vmem:[#allocation11] sm:$0xf] %v317
    %320 = vst [vmem:[#allocation11 + $0x4] sm:$0xf] %v318
    %v321 = vmax.f32 %v313, 0.0
    %v322 = vmax.f32 %v315, 0.0
    %v323 = vld [vmem:[#allocation10] sm:$0xf]
    %v324 = vld [vmem:[#allocation10 + $0x4] sm:$0xf]
    %v325 = vld [vmem:[#allocation10 + $0x8] sm:$0xf]
    %v326 = vld [vmem:[#allocation10 + $0xc] sm:$0xf]
    %v327 = vld [vmem:[#allocation10 + $0x10] sm:$0xf]
    %v328 = vld [vmem:[#allocation10 + $0x14] sm:$0xf]
    %v329 = vld [vmem:[#allocation10 + $0x18] sm:$0xf]
    %v330 = vld [vmem:[#allocation10 + $0x1c] sm:$0xf]
    %v331 = vld [vmem:[#allocation10 + $0x20] sm:$0xf]
    %v332 = vld [vmem:[#allocation10 + $0x24] sm:$0xf]
    %v333 = vld [vmem:[#allocation10 + $0x28] sm:$0xf]
    %v334 = vld [vmem:[#allocation10 + $0x2c] sm:$0xf]
    %v335 = vld [vmem:[#allocation10 + $0x30] sm:$0xf]
    %v336 = vld [vmem:[#allocation10 + $0x34] sm:$0xf]
    %v337 = vld [vmem:[#allocation10 + $0x38] sm:$0xf]
    %v338 = vld [vmem:[#allocation10 + $0x3c] sm:$0xf]
    %v339 = vpack.c.bf16 %v322, %v321
    %v340 = vld [vmem:[%s5 + $0x3] sm:$0x1]
    %v342 = vperm.slane %v340, 0
    %v360 = vunpack.c.l.b16 %v323
    %v361 = vunpack.c.l.b16 %v324
    %v362 = vunpack.c.l.b16 %v325
    %v363 = vunpack.c.l.b16 %v326
    %v364 = vunpack.c.l.b16 %v327
    %v365 = vunpack.c.l.b16 %v328
    %v366 = vunpack.c.l.b16 %v329
    %v367 = vunpack.c.l.b16 %v330
    %v368 = vunpack.c.l.b16 %v331
    %v369 = vunpack.c.l.b16 %v332
    %v370 = vunpack.c.l.b16 %v333
    %v371 = vunpack.c.l.b16 %v334
    %v372 = vunpack.c.l.b16 %v335
    %v373 = vunpack.c.l.b16 %v336
    %v374 = vunpack.c.l.b16 %v337
    %v375 = vunpack.c.l.b16 %v338
    %v376 = vpack.c.b16 %v361, %v360
    %v377 = vpack.c.b16 %v363, %v362
    %v378 = vpack.c.b16 %v365, %v364
    %v379 = vpack.c.b16 %v367, %v366
    %v380 = vpack.c.b16 %v369, %v368
    %v381 = vpack.c.b16 %v371, %v370
    %v382 = vpack.c.b16 %v373, %v372
    %v383 = vpack.c.b16 %v375, %v374
    %392 = vmatpush.bf16.msra.mxu0 %v383
    %393 = vmatpush.bf16.msra.mxu0 %v382
    %394 = vmatpush.bf16.msra.mxu0 %v381
    %395 = vmatpush.bf16.msra.mxu0 %v380
    %396 = vmatpush.bf16.msra.mxu0 %v379
    %397 = vmatpush.bf16.msra.mxu0 %v378
    %398 = vmatpush.bf16.msra.mxu0 %v377
    %399 = vmatpush.bf16.msra.mxu0 %v376
    %400 = vmatmul.bf16.gmra.mxu0 %v339
    %v401 = vpop.f32.mrf.mxu0
    %v402 = vadd.f32 %v342, %v401
    %v403 = vpop.f32.mrf.mxu0
    %v404 = vadd.f32 %v342, %v403
    %405 = vdwg.mxu0
    %v406 = vpack.c.bf16 %v402, %v402
    %v407 = vpack.c.bf16 %v404, %v404
    %408 = vst [vmem:[#allocation12] sm:$0xf] %v406
    %409 = vst [vmem:[#allocation12 + $0x4] sm:$0xf] %v407
    // Predicated region
    $region46: #{tpu_custom_call.1} parent=1 // pred_check
      _
    $region47: #{tpu_custom_call.1} parent=1 // pred_check_branch
      %411 = sbr.rel (0) target = $region49
    $region48: #{tpu_custom_call.1} parent=1 // pred_region
      %413 = vsyncadd [#allocation4], 0
      %s414 = sshll.u32 [#allocation11], 4
      %s415 = int_to_ptr.vmem [resolvable:$true] %s414
      %s416 = sshll.u32 %s6, 4
      %s417 = int_to_ptr.hbm [resolvable:$true] %s416
      %422 = dma.vmem_to_hbm [thread:$0]  %s415, 128, %s417, [#allocation4], 64, 64, 4
    $region49: #{tpu_custom_call.1} parent=1 // pred_fallthru
      _
    // Predicated region
    $region50: #{tpu_custom_call.1} parent=1 // pred_check
      _
    $region51: #{tpu_custom_call.1} parent=1 // pred_check_branch
      %424 = sbr.rel (0) target = $region53
    $region52: #{tpu_custom_call.1} parent=1 // pred_region
      %426 = vsyncadd [#allocation13], 0
      %s427 = sshll.u32 [#allocation12], 4
      %s428 = int_to_ptr.vmem [resolvable:$true] %s427
      %s429 = sshll.u32 %s7, 4
      %s430 = int_to_ptr.hbm [resolvable:$true] %s429
      %435 = dma.vmem_to_hbm [thread:$0]  %s428, 128, %s430, [#allocation13], 64, 64, 4
    $region53: #{tpu_custom_call.1} parent=1 // pred_fallthru
      _
    // Predicated region
    $region54: #{tpu_custom_call.1} parent=1 // pred_check
      _
    $region55: #{tpu_custom_call.1} parent=1 // pred_check_branch
      %437 = sbr.rel (0) target = $region57
    $region56: #{tpu_custom_call.1} parent=1 // pred_region
      %439 = dma.done [#allocation4], 128
    $region57: #{tpu_custom_call.1} parent=1 // pred_fallthru
      _
    // Predicated region
    $region58: #{tpu_custom_call.1} parent=1 // pred_check
      _
    $region59: #{tpu_custom_call.1} parent=1 // pred_check_branch
      %441 = sbr.rel (0) target = $region61
    $region60: #{tpu_custom_call.1} parent=1 // pred_region
      %443 = dma.done [#allocation13], 128
    $region61: #{tpu_custom_call.1} parent=1 // pred_fallthru
      _
    %444 = vsyncpa [#allocation3], 1
    %445 = vsyncpa [#allocation6], 1
    %446 = vsyncpa [#allocation9], 1
    %447 = vsyncpa [#allocation4], 1
    %448 = vsyncpa [#allocation13], 1

// kernel: tpu_custom_call.1
$region0: #{tpu_custom_call.1}
  #allocation0 [shape = 'u32[]', space=smem, size = 0x4, offset = 0x4, fixed_abs, tag = 'smem constant byte address 0x4 - core index']
  #allocation1 [shape = 'u32[72,128]{1,0:T(1,128)}', space=vmem, size = 0x9000, scoped, tag = 'internal scratch']
  %s0 = inlined_call_operand.hbm [shape: f32[16,32], index: 0, kind: input, shape index: {}]
  %s1 = inlined_call_operand.hbm [shape: bf16[32,128], index: 1, kind: input, shape index: {}]
  %s2 = inlined_call_operand.hbm [shape: bf16[128,128], index: 2, kind: input, shape index: {}]
  %s3 = inlined_call_operand.hbm [shape: bf16[128,128], index: 3, kind: input, shape index: {}]
  %s4 = inlined_call_operand.hbm [shape: bf16[128,128], index: 4, kind: input, shape index: {}]
  %s5 = inlined_call_operand.vmem [shape: f32[1,512], index: 5, kind: input, shape index: {}]
  %s6 = inlined_call_operand.hbm [shape: bf16[16,128], index: 6, kind: output, shape index: {0}]
  %s7 = inlined_call_operand.hbm [shape: bf16[16,128], index: 7, kind: output, shape index: {1}]
  %8 = xla_tuple %s6, %s7
  %s9 = sld [smem:[#allocation0]]
  $region62: #{tpu_custom_call.1} parent=0
    _
  %s11 = ssub.s32 1, %s9
  %s12 = scalar_select 0, %s11, %s9
  $region1: #{tpu_custom_call.1} parent=0
    #allocation2 [shape = 'u8[8192]{0}', space=vmem, size = 0x2000, scoped, tag = 'input window, operand 0, single buffered']
    #allocation3 [shape = 's32[1]{0}', space=sflag, size = 0x4, scoped, tag = 'scoped memory for tpu_custom_call.1']
    #allocation4 [shape = 's32[1]{0}', space=sflag, size = 0x4, scoped, tag = 'scoped memory for tpu_custom_call.1']
    #allocation5 [shape = 'u8[8192]{0}', space=vmem, size = 0x2000, scoped, tag = 'input window, operand 1, single buffered']
    #allocation6 [shape = 's32[1]{0}', space=sflag, size = 0x4, scoped, tag = 'scoped memory for tpu_custom_call.1']
    #allocation7 [shape = 'u8[32768]{0}', space=vmem, size = 0x8000, scoped, tag = 'input window, operand 2, single buffered']
    #allocation8 [shape = 'u8[32768]{0}', space=vmem, size = 0x8000, scoped, tag = 'input window, operand 3, single buffered']
    #allocation9 [shape = 's32[1]{0}', space=sflag, size = 0x4, scoped, tag = 'scoped memory for tpu_custom_call.1']
    #allocation10 [shape = 'u8[32768]{0}', space=vmem, size = 0x8000, scoped, tag = 'input window, operand 4, single buffered']
    #allocation11 [shape = 'u8[4096]{0}', space=vmem, size = 0x1000, scoped, tag = 'output window, operand 0, single buffered']
    #allocation12 [shape = 'u8[4096]{0}', space=vmem, size = 0x1000, scoped, tag = 'output window, operand 1, single buffered']
    #allocation13 [shape = 's32[1]{0}', space=sflag, size = 0x4, scoped, tag = 'scoped memory for tpu_custom_call.1']
    %13 = vsyncpa [#allocation3], 0
    %14 = vsyncpa [#allocation6], 0
    %15 = vsyncpa [#allocation9], 0
    %16 = vsyncpa [#allocation4], 0
    %17 = vsyncpa [#allocation13], 0
    // Predicated region
    $region2: #{tpu_custom_call.1} parent=1 // pred_check
      _
    $region3: #{tpu_custom_call.1} parent=1 // pred_check_branch
      %19 = sbr.rel (0) target = $region5
    $region4: #{tpu_custom_call.1} parent=1 // pred_region
      %21 = vsyncadd [#allocation3], 0
      %s22 = sshll.u32 %s0, 4
      %s23 = int_to_ptr.hbm [resolvable:$true] %s22
      %s24 = sshll.u32 [#allocation2], 4
      %s25 = int_to_ptr.vmem [resolvable:$true] %s24
      %30 = dma.hbm_to_vmem [thread:$0]  %s23, 256, %s25, [#allocation3], 128, 128, 8
    $region5: #{tpu_custom_call.1} parent=1 // pred_fallthru
      _
    // Predicated region
    $region6: #{tpu_custom_call.1} parent=1 // pred_check
      _
    $region7: #{tpu_custom_call.1} parent=1 // pred_check_branch
      %32 = sbr.rel (0) target = $region9
    $region8: #{tpu_custom_call.1} parent=1 // pred_region
      %34 = vsyncadd [#allocation6], 0
      %s35 = sshll.u32 %s1, 4
      %s36 = int_to_ptr.hbm [resolvable:$true] %s35
      %s37 = sshll.u32 [#allocation5], 4
      %s38 = int_to_ptr.vmem [resolvable:$true] %s37
      %43 = dma.hbm_to_vmem [thread:$0]  %s36, 256, %s38, [#allocation6], 64, 64, 4
    $region9: #{tpu_custom_call.1} parent=1 // pred_fallthru
      _
    // Predicated region
    $region10: #{tpu_custom_call.1} parent=1 // pred_check
      _
    $region11: #{tpu_custom_call.1} parent=1 // pred_check_branch
      %45 = sbr.rel (0) target = $region13
    $region12: #{tpu_custom_call.1} parent=1 // pred_region
      %47 = vsyncadd [#allocation6], 0
      %s48 = sshll.u32 %s2, 4
      %s49 = int_to_ptr.hbm [resolvable:$true] %s48
      %s50 = sshll.u32 [#allocation7], 4
      %s51 = int_to_ptr.vmem [resolvable:$true] %s50
      %56 = dma.hbm_to_vmem [thread:$0]  %s49, 1024, %s51, [#allocation6], 64, 64, 4
    $region13: #{tpu_custom_call.1} parent=1 // pred_fallthru
      _
    // Predicated region
    $region14: #{tpu_custom_call.1} parent=1 // pred_check
      _
    $region15: #{tpu_custom_call.1} parent=1 // pred_check_branch
      %58 = sbr.rel (0) target = $region17
    $region16: #{tpu_custom_call.1} parent=1 // pred_region
      %60 = vsyncadd [#allocation9], 0
      %s61 = sshll.u32 %s3, 4
      %s62 = int_to_ptr.hbm [resolvable:$true] %s61
      %s63 = sshll.u32 [#allocation8], 4
      %s64 = int_to_ptr.vmem [resolvable:$true] %s63
      %69 = dma.hbm_to_vmem [thread:$0]  %s62, 1024, %s64, [#allocation9], 64, 64, 4
    $region17: #{tpu_custom_call.1} parent=1 // pred_fallthru
      _
    // Predicated region
    $region18: #{tpu_custom_call.1} parent=1 // pred_check
      _
    $region19: #{tpu_custom_call.1} parent=1 // pred_check_branch
      %71 = sbr.rel (0) target = $region21
    $region20: #{tpu_custom_call.1} parent=1 // pred_region
      %73 = vsyncadd [#allocation9], 0
      %s74 = sshll.u32 %s4, 4
      %s75 = int_to_ptr.hbm [resolvable:$true] %s74
      %s76 = sshll.u32 [#allocation10], 4
      %s77 = int_to_ptr.vmem [resolvable:$true] %s76
      %82 = dma.hbm_to_vmem [thread:$0]  %s75, 1024, %s77, [#allocation9], 64, 64, 4
    $region21: #{tpu_custom_call.1} parent=1 // pred_fallthru
      _
    // Predicated region
    $region22: #{tpu_custom_call.1} parent=1 // pred_check
      _
    $region23: #{tpu_custom_call.1} parent=1 // pred_check_branch
      %84 = sbr.rel (0) target = $region25
    $region24: #{tpu_custom_call.1} parent=1 // pred_region
      _
    $region25: #{tpu_custom_call.1} parent=1 // pred_fallthru
      _
    // Predicated region
    $region26: #{tpu_custom_call.1} parent=1 // pred_check
      _
    $region27: #{tpu_custom_call.1} parent=1 // pred_check_branch
      %86 = sbr.rel (0) target = $region29
    $region28: #{tpu_custom_call.1} parent=1 // pred_region
      %88 = dma.done [#allocation3], 256
    $region29: #{tpu_custom_call.1} parent=1 // pred_fallthru
      _
    // Predicated region
    $region30: #{tpu_custom_call.1} parent=1 // pred_check
      _
    $region31: #{tpu_custom_call.1} parent=1 // pred_check_branch
      %90 = sbr.rel (0) target = $region33
    $region32: #{tpu_custom_call.1} parent=1 // pred_region
      %92 = dma.done [#allocation6], 256
    $region33: #{tpu_custom_call.1} parent=1 // pred_fallthru
      _
    // Predicated region
    $region34: #{tpu_custom_call.1} parent=1 // pred_check
      _
    $region35: #{tpu_custom_call.1} parent=1 // pred_check_branch
      %94 = sbr.rel (0) target = $region37
    $region36: #{tpu_custom_call.1} parent=1 // pred_region
      %96 = dma.done [#allocation6], 1024
    $region37: #{tpu_custom_call.1} parent=1 // pred_fallthru
      _
    // Predicated region
    $region38: #{tpu_custom_call.1} parent=1 // pred_check
      _
    $region39: #{tpu_custom_call.1} parent=1 // pred_check_branch
      %98 = sbr.rel (0) target = $region41
    $region40: #{tpu_custom_call.1} parent=1 // pred_region
      %100 = dma.done [#allocation9], 1024
    $region41: #{tpu_custom_call.1} parent=1 // pred_fallthru
      _
    // Predicated region
    $region42: #{tpu_custom_call.1} parent=1 // pred_check
      _
    $region43: #{tpu_custom_call.1} parent=1 // pred_check_branch
      %102 = sbr.rel (0) target = $region45
    $region44: #{tpu_custom_call.1} parent=1 // pred_region
      %104 = dma.done [#allocation9], 1024
    $region45: #{tpu_custom_call.1} parent=1 // pred_fallthru
      _
    %v106 = vld [vmem:[#allocation2] sm:$0xff]
    %v107 = vld [vmem:[#allocation2 + $0x8] sm:$0xff]
    %v108 = vld [vmem:[#allocation5] sm:$0xf]
    %v109 = vld [vmem:[#allocation5 + $0x4] sm:$0xf]
    %v110 = vld [vmem:[#allocation5 + $0x8] sm:$0xf]
    %v111 = vld [vmem:[#allocation5 + $0xc] sm:$0xf]
    %v112 = vpack.c.bf16 %v107, %v106
    %v113 = vld [vmem:[%s5] sm:$0x1]
    %v115 = vperm.slane %v113, 0
    %v121 = vunpack.c.l.b16 %v108
    %v122 = vunpack.c.l.b16 %v109
    %v123 = vunpack.c.l.b16 %v110
    %v124 = vunpack.c.l.b16 %v111
    %v125 = vpack.c.b16 %v122, %v121
    %v126 = vpack.c.b16 %v124, %v123
    %vm129 = vcmask 261120
    %v131 = vsel %vm129, %v112, 0
    %133 = vmatpush.bf16.msra.mxu0 0
    %134 = vmatpush.bf16.msra.mxu0 0
    %135 = vmatpush.bf16.msra.mxu0 0
    %136 = vmatpush.bf16.msra.mxu0 0
    %137 = vmatpush.bf16.msra.mxu0 0
    %138 = vmatpush.bf16.msra.mxu0 0
    %139 = vmatpush.bf16.msra.mxu0 %v126
    %140 = vmatpush.bf16.msra.mxu0 %v125
    %141 = vmatmul.bf16.gmra.mxu0 %v131
    %v142 = vpop.f32.mrf.mxu0
    %v143 = vadd.f32 %v115, %v142
    %v144 = vpop.f32.mrf.mxu0
    %v145 = vadd.f32 %v115, %v144
    %146 = vdwg.mxu0
    %v147 = vmax.f32 %v143, 0.0
    %v148 = vmax.f32 %v145, 0.0
    %v149 = vld [vmem:[#allocation7] sm:$0xf]
    %v150 = vld [vmem:[#allocation7 + $0x4] sm:$0xf]
    %v151 = vld [vmem:[#allocation7 + $0x8] sm:$0xf]
    %v152 = vld [vmem:[#allocation7 + $0xc] sm:$0xf]
    %v153 = vld [vmem:[#allocation7 + $0x10] sm:$0xf]
    %v154 = vld [vmem:[#allocation7 + $0x14] sm:$0xf]
    %v155 = vld [vmem:[#allocation7 + $0x18] sm:$0xf]
    %v156 = vld [vmem:[#allocation7 + $0x1c] sm:$0xf]
    %v157 = vld [vmem:[#allocation7 + $0x20] sm:$0xf]
    %v158 = vld [vmem:[#allocation7 + $0x24] sm:$0xf]
    %v159 = vld [vmem:[#allocation7 + $0x28] sm:$0xf]
    %v160 = vld [vmem:[#allocation7 + $0x2c] sm:$0xf]
    %v161 = vld [vmem:[#allocation7 + $0x30] sm:$0xf]
    %v162 = vld [vmem:[#allocation7 + $0x34] sm:$0xf]
    %v163 = vld [vmem:[#allocation7 + $0x38] sm:$0xf]
    %v164 = vld [vmem:[#allocation7 + $0x3c] sm:$0xf]
    %v165 = vpack.c.bf16 %v148, %v147
    %v166 = vld [vmem:[%s5 + $0x1] sm:$0x1]
    %v168 = vperm.slane %v166, 0
    %v186 = vunpack.c.l.b16 %v149
    %v187 = vunpack.c.l.b16 %v150
    %v188 = vunpack.c.l.b16 %v151
    %v189 = vunpack.c.l.b16 %v152
    %v190 = vunpack.c.l.b16 %v153
    %v191 = vunpack.c.l.b16 %v154
    %v192 = vunpack.c.l.b16 %v155
    %v193 = vunpack.c.l.b16 %v156
    %v194 = vunpack.c.l.b16 %v157
    %v195 = vunpack.c.l.b16 %v158
    %v196 = vunpack.c.l.b16 %v159
    %v197 = vunpack.c.l.b16 %v160
    %v198 = vunpack.c.l.b16 %v161
    %v199 = vunpack.c.l.b16 %v162
    %v200 = vunpack.c.l.b16 %v163
    %v201 = vunpack.c.l.b16 %v164
    %v202 = vpack.c.b16 %v187, %v186
    %v203 = vpack.c.b16 %v189, %v188
    %v204 = vpack.c.b16 %v191, %v190
    %v205 = vpack.c.b16 %v193, %v192
    %v206 = vpack.c.b16 %v195, %v194
    %v207 = vpack.c.b16 %v197, %v196
    %v208 = vpack.c.b16 %v199, %v198
    %v209 = vpack.c.b16 %v201, %v200
    %218 = vmatpush.bf16.msra.mxu0 %v209
    %219 = vmatpush.bf16.msra.mxu0 %v208
    %220 = vmatpush.bf16.msra.mxu0 %v207
    %221 = vmatpush.bf16.msra.mxu0 %v206
    %222 = vmatpush.bf16.msra.mxu0 %v205
    %223 = vmatpush.bf16.msra.mxu0 %v204
    %224 = vmatpush.bf16.msra.mxu0 %v203
    %225 = vmatpush.bf16.msra.mxu0 %v202
    %226 = vmatmul.bf16.gmra.mxu0 %v165
    %v227 = vpop.f32.mrf.mxu0
    %v228 = vadd.f32 %v168, %v227
    %v229 = vpop.f32.mrf.mxu0
    %v230 = vadd.f32 %v168, %v229
    %231 = vdwg.mxu0
    %v232 = vmax.f32 %v228, 0.0
    %v233 = vmax.f32 %v230, 0.0
    %v234 = vld [vmem:[#allocation8] sm:$0xf]
    %v235 = vld [vmem:[#allocation8 + $0x4] sm:$0xf]
    %v236 = vld [vmem:[#allocation8 + $0x8] sm:$0xf]
    %v237 = vld [vmem:[#allocation8 + $0xc] sm:$0xf]
    %v238 = vld [vmem:[#allocation8 + $0x10] sm:$0xf]
    %v239 = vld [vmem:[#allocation8 + $0x14] sm:$0xf]
    %v240 = vld [vmem:[#allocation8 + $0x18] sm:$0xf]
    %v241 = vld [vmem:[#allocation8 + $0x1c] sm:$0xf]
    %v242 = vld [vmem:[#allocation8 + $0x20] sm:$0xf]
    %v243 = vld [vmem:[#allocation8 + $0x24] sm:$0xf]
    %v244 = vld [vmem:[#allocation8 + $0x28] sm:$0xf]
    %v245 = vld [vmem:[#allocation8 + $0x2c] sm:$0xf]
    %v246 = vld [vmem:[#allocation8 + $0x30] sm:$0xf]
    %v247 = vld [vmem:[#allocation8 + $0x34] sm:$0xf]
    %v248 = vld [vmem:[#allocation8 + $0x38] sm:$0xf]
    %v249 = vld [vmem:[#allocation8 + $0x3c] sm:$0xf]
    %v250 = vpack.c.bf16 %v233, %v232
    %v251 = vld [vmem:[%s5 + $0x2] sm:$0x1]
    %v253 = vperm.slane %v251, 0
    %v271 = vunpack.c.l.b16 %v234
    %v272 = vunpack.c.l.b16 %v235
    %v273 = vunpack.c.l.b16 %v236
    %v274 = vunpack.c.l.b16 %v237
    %v275 = vunpack.c.l.b16 %v238
    %v276 = vunpack.c.l.b16 %v239
    %v277 = vunpack.c.l.b16 %v240
    %v278 = vunpack.c.l.b16 %v241
    %v279 = vunpack.c.l.b16 %v242
    %v280 = vunpack.c.l.b16 %v243
    %v281 = vunpack.c.l.b16 %v244
    %v282 = vunpack.c.l.b16 %v245
    %v283 = vunpack.c.l.b16 %v246
    %v284 = vunpack.c.l.b16 %v247
    %v285 = vunpack.c.l.b16 %v248
    %v286 = vunpack.c.l.b16 %v249
    %v287 = vpack.c.b16 %v272, %v271
    %v288 = vpack.c.b16 %v274, %v273
    %v289 = vpack.c.b16 %v276, %v275
    %v290 = vpack.c.b16 %v278, %v277
    %v291 = vpack.c.b16 %v280, %v279
    %v292 = vpack.c.b16 %v282, %v281
    %v293 = vpack.c.b16 %v284, %v283
    %v294 = vpack.c.b16 %v286, %v285
    %303 = vmatpush.bf16.msra.mxu0 %v294
    %304 = vmatpush.bf16.msra.mxu0 %v293
    %305 = vmatpush.bf16.msra.mxu0 %v292
    %306 = vmatpush.bf16.msra.mxu0 %v291
    %307 = vmatpush.bf16.msra.mxu0 %v290
    %308 = vmatpush.bf16.msra.mxu0 %v289
    %309 = vmatpush.bf16.msra.mxu0 %v288
    %310 = vmatpush.bf16.msra.mxu0 %v287
    %311 = vmatmul.bf16.gmra.mxu0 %v250
    %v312 = vpop.f32.mrf.mxu0
    %v313 = vadd.f32 %v253, %v312
    %v314 = vpop.f32.mrf.mxu0
    %v315 = vadd.f32 %v253, %v314
    %316 = vdwg.mxu0
    %v317 = vpack.c.bf16 %v313, %v313
    %v318 = vpack.c.bf16 %v315, %v315
    %319 = vst [vmem:[#allocation11] sm:$0xf] %v317
    %320 = vst [vmem:[#allocation11 + $0x4] sm:$0xf] %v318
    %v321 = vmax.f32 %v313, 0.0
    %v322 = vmax.f32 %v315, 0.0
    %v323 = vld [vmem:[#allocation10] sm:$0xf]
    %v324 = vld [vmem:[#allocation10 + $0x4] sm:$0xf]
    %v325 = vld [vmem:[#allocation10 + $0x8] sm:$0xf]
    %v326 = vld [vmem:[#allocation10 + $0xc] sm:$0xf]
    %v327 = vld [vmem:[#allocation10 + $0x10] sm:$0xf]
    %v328 = vld [vmem:[#allocation10 + $0x14] sm:$0xf]
    %v329 = vld [vmem:[#allocation10 + $0x18] sm:$0xf]
    %v330 = vld [vmem:[#allocation10 + $0x1c] sm:$0xf]
    %v331 = vld [vmem:[#allocation10 + $0x20] sm:$0xf]
    %v332 = vld [vmem:[#allocation10 + $0x24] sm:$0xf]
    %v333 = vld [vmem:[#allocation10 + $0x28] sm:$0xf]
    %v334 = vld [vmem:[#allocation10 + $0x2c] sm:$0xf]
    %v335 = vld [vmem:[#allocation10 + $0x30] sm:$0xf]
    %v336 = vld [vmem:[#allocation10 + $0x34] sm:$0xf]
    %v337 = vld [vmem:[#allocation10 + $0x38] sm:$0xf]
    %v338 = vld [vmem:[#allocation10 + $0x3c] sm:$0xf]
    %v339 = vpack.c.bf16 %v322, %v321
    %v340 = vld [vmem:[%s5 + $0x3] sm:$0x1]
    %v342 = vperm.slane %v340, 0
    %v360 = vunpack.c.l.b16 %v323
    %v361 = vunpack.c.l.b16 %v324
    %v362 = vunpack.c.l.b16 %v325
    %v363 = vunpack.c.l.b16 %v326
    %v364 = vunpack.c.l.b16 %v327
    %v365 = vunpack.c.l.b16 %v328
    %v366 = vunpack.c.l.b16 %v329
    %v367 = vunpack.c.l.b16 %v330
    %v368 = vunpack.c.l.b16 %v331
    %v369 = vunpack.c.l.b16 %v332
    %v370 = vunpack.c.l.b16 %v333
    %v371 = vunpack.c.l.b16 %v334
    %v372 = vunpack.c.l.b16 %v335
    %v373 = vunpack.c.l.b16 %v336
    %v374 = vunpack.c.l.b16 %v337
    %v375 = vunpack.c.l.b16 %v338
    %v376 = vpack.c.b16 %v361, %v360
    %v377 = vpack.c.b16 %v363, %v362
    %v378 = vpack.c.b16 %v365, %v364
    %v379 = vpack.c.b16 %v367, %v366
    %v380 = vpack.c.b16 %v369, %v368
    %v381 = vpack.c.b16 %v371, %v370
    %v382 = vpack.c.b16 %v373, %v372
    %v383 = vpack.c.b16 %v375, %v374
    %392 = vmatpush.bf16.msra.mxu0 %v383
    %393 = vmatpush.bf16.msra.mxu0 %v382
    %394 = vmatpush.bf16.msra.mxu0 %v381
    %395 = vmatpush.bf16.msra.mxu0 %v380
    %396 = vmatpush.bf16.msra.mxu0 %v379
    %397 = vmatpush.bf16.msra.mxu0 %v378
    %398 = vmatpush.bf16.msra.mxu0 %v377
    %399 = vmatpush.bf16.msra.mxu0 %v376
    %400 = vmatmul.bf16.gmra.mxu0 %v339
    %v401 = vpop.f32.mrf.mxu0
    %v402 = vadd.f32 %v342, %v401
    %v403 = vpop.f32.mrf.mxu0
    %v404 = vadd.f32 %v342, %v403
    %405 = vdwg.mxu0
    %v406 = vpack.c.bf16 %v402, %v402
    %v407 = vpack.c.bf16 %v404, %v404
    %408 = vst [vmem:[#allocation12] sm:$0xf] %v406
    %409 = vst [vmem:[#allocation12 + $0x4] sm:$0xf] %v407
    // Predicated region
    $region46: #{tpu_custom_call.1} parent=1 // pred_check
      _
    $region47: #{tpu_custom_call.1} parent=1 // pred_check_branch
      %411 = sbr.rel (0) target = $region49
    $region48: #{tpu_custom_call.1} parent=1 // pred_region
      %413 = vsyncadd [#allocation4], 0
      %s414 = sshll.u32 [#allocation11], 4
      %s415 = int_to_ptr.vmem [resolvable:$true] %s414
      %s416 = sshll.u32 %s6, 4
      %s417 = int_to_ptr.hbm [resolvable:$true] %s416
      %422 = dma.vmem_to_hbm [thread:$0]  %s415, 128, %s417, [#allocation4], 64, 64, 4
    $region49: #{tpu_custom_call.1} parent=1 // pred_fallthru
      _
    // Predicated region
    $region50: #{tpu_custom_call.1} parent=1 // pred_check
      _
    $region51: #{tpu_custom_call.1} parent=1 // pred_check_branch
      %424 = sbr.rel (0) target = $region53
    $region52: #{tpu_custom_call.1} parent=1 // pred_region
      %426 = vsyncadd [#allocation13], 0
      %s427 = sshll.u32 [#allocation12], 4
      %s428 = int_to_ptr.vmem [resolvable:$true] %s427
      %s429 = sshll.u32 %s7, 4
      %s430 = int_to_ptr.hbm [resolvable:$true] %s429
      %435 = dma.vmem_to_hbm [thread:$0]  %s428, 128, %s430, [#allocation13], 64, 64, 4
    $region53: #{tpu_custom_call.1} parent=1 // pred_fallthru
      _
    // Predicated region
    $region54: #{tpu_custom_call.1} parent=1 // pred_check
      _
    $region55: #{tpu_custom_call.1} parent=1 // pred_check_branch
      %437 = sbr.rel (0) target = $region57
    $region56: #{tpu_custom_call.1} parent=1 // pred_region
      %439 = dma.done [#allocation4], 128
    $region57: #{tpu_custom_call.1} parent=1 // pred_fallthru
      _
    // Predicated region
    $region58: #{tpu_custom_call.1} parent=1 // pred_check
      _
    $region59: #{tpu_custom_call.1} parent=1 // pred_check_branch
      %441 = sbr.rel (0) target = $region61
    $region60: #{tpu_custom_call.1} parent=1 // pred_region
      %443 = dma.done [#allocation13], 128
    $region61: #{tpu_custom_call.1} parent=1 // pred_fallthru
      _
    %444 = vsyncpa [#allocation3], 1
    %445 = vsyncpa [#allocation6], 1
    %446 = vsyncpa [#allocation9], 1
    %447 = vsyncpa [#allocation4], 1
    %448 = vsyncpa [#allocation13], 1

</llo_original>
